<compile_context>
chip_gen: v7x
topology: tpu7x:2x2x1
jax: 0.10.0
libtpu: 0.0.40
codegen_flags: <defaults>
</compile_context>

<pallas_src>
import jax
import jax.numpy as jnp
from jax.experimental import pallas as pl
from jax.experimental.pallas import tpu as pltpu

JACCARD_THRESH = 0.5
NEG_POS_RATIO = 3
VARIANCES = (0.1, 0.2)


# ----------------------------- Pallas kernel --------------------------------

def _perbox_loss_kernel(conf_ref, label_ref, locp_ref, loct_ref, ce_ref, sl1_ref):
    """Per-image (full-D tile) cross-entropy + masked smooth-L1, lane-dense.

    Block shapes (leading batch dim of 1 kept explicit):
      conf_ref  : (1, C, Dp)  classes on sublanes, default boxes on lanes (bf16/f32)
      label_ref : (1, 1, Dp)  int32 matched labels (0 = background / padding)
      locp_ref  : (1, 4, Dp)  predicted loc offsets (f32)
      loct_ref  : (1, 4, Dp)  encoded target offsets (f32)
      ce_ref    : (1, 1, Dp)  per-box softmax cross entropy
      sl1_ref   : (1, 1, Dp)  per-box smooth-L1 (summed over 4 coords, positives only)
    """
    conf = conf_ref[...].astype(jnp.float32)      # (1, C, Dp) — math stays f32
    label = label_ref[...]                        # (1, 1, Dp) int32

    # Cross entropy per box: logsumexp over the class (sublane) axis minus the
    # target-class logit (one-hot gather, also a sublane reduce).
    m = jnp.max(conf, axis=1, keepdims=True)                               # (1,1,Dp)
    lse = jnp.log(jnp.sum(jnp.exp(conf - m), axis=1, keepdims=True)) + m   # (1,1,Dp)
    cls_iota = jax.lax.broadcasted_iota(jnp.int32, conf.shape, 1)          # (1,C,Dp)
    onehot = (cls_iota == label).astype(conf.dtype)
    logit_t = jnp.sum(conf * onehot, axis=1, keepdims=True)                # (1,1,Dp)
    ce_ref[...] = lse - logit_t

    # Smooth-L1 over the 4 box coords, restricted to positive boxes.  Mask the
    # difference *before* the math so NaN/inf from degenerate encoded targets
    # of non-positive boxes cannot leak into the sum.
    pos = label > 0                                                        # (1,1,Dp)
    diff = jnp.where(pos, locp_ref[...] - loct_ref[...], 0.0)              # (1,4,Dp)
    d = jnp.abs(diff)
    sl1 = jnp.where(d < 1.0, 0.5 * d * d, d - 0.5)
    # Only the cheap sublane reduce in-kernel; cross-lane / cross-batch sums
    # are done once in the wrapper (which needs them anyway).
    sl1_ref[...] = jnp.sum(sl1, axis=1, keepdims=True)                     # (1,1,Dp)


def _perbox_losses(conf_t, label3, locp_t, loct_t):
    """conf_t (B,C,Dp), label3 (B,1,Dp), locp_t/loct_t (B,4,Dp) -> ce (B,Dp), sl1 (B,Dp)."""
    B, C, Dp = conf_t.shape
    ce, sl1 = pl.pallas_call(
        _perbox_loss_kernel,
        grid=(B,),
        in_specs=[
            pl.BlockSpec((1, C, Dp), lambda b: (b, 0, 0)),
            pl.BlockSpec((1, 1, Dp), lambda b: (b, 0, 0)),
            pl.BlockSpec((1, 4, Dp), lambda b: (b, 0, 0)),
            pl.BlockSpec((1, 4, Dp), lambda b: (b, 0, 0)),
        ],
        out_specs=(
            pl.BlockSpec((1, 1, Dp), lambda b: (b, 0, 0)),
            pl.BlockSpec((1, 1, Dp), lambda b: (b, 0, 0)),
        ),
        out_shape=(
            jax.ShapeDtypeStruct((B, 1, Dp), jnp.float32),
            jax.ShapeDtypeStruct((B, 1, Dp), jnp.float32),
        ),
        compiler_params=pltpu.CompilerParams(
            # Batch is the only grid axis; keep it "parallel" for the v7x
            # megacore split (no-op on v5e/v6e).
            dimension_semantics=("parallel",)),
    )(conf_t, label3, locp_t, loct_t)
    return ce[:, 0, :], sl1[:, 0, :]


# ---------------------- SSD match() (plain-JAX glue) -------------------------

def _point_form(boxes):
    # (cx, cy, w, h) -> (xmin, ymin, xmax, ymax)
    return jnp.concatenate([boxes[:, :2] - boxes[:, 2:] / 2.0,
                            boxes[:, :2] + boxes[:, 2:] / 2.0], axis=1)


def _jaccard(box_a, box_b):
    max_xy = jnp.minimum(box_a[:, None, 2:], box_b[None, :, 2:])
    min_xy = jnp.maximum(box_a[:, None, :2], box_b[None, :, :2])
    wh = jnp.clip(max_xy - min_xy, 0.0)
    inter = wh[..., 0] * wh[..., 1]
    area_a = ((box_a[:, 2] - box_a[:, 0]) * (box_a[:, 3] - box_a[:, 1]))[:, None]
    area_b = ((box_b[:, 2] - box_b[:, 0]) * (box_b[:, 3] - box_b[:, 1]))[None, :]
    return inter / (area_a + area_b - inter)


def _encode(matched, priors, variances):
    g_cxcy = (matched[:, :2] + matched[:, 2:]) / 2.0 - priors[:, :2]
    g_cxcy = g_cxcy / (variances[0] * priors[:, 2:])
    g_wh = (matched[:, 2:] - matched[:, :2]) / priors[:, 2:]
    g_wh = jnp.log(g_wh) / variances[1]
    return jnp.concatenate([g_cxcy, g_wh], axis=1)


def _match_single(truths, labels, dbox, threshold, variances):
    # TODO(synk): data-dependent scatter/gather box assignment stays in plain
    # JAX; assumes targets carry no zero-padded dummy GT rows (a padded row
    # would force-claim one prior and create a spurious positive).
    overlaps = _jaccard(truths, _point_form(dbox))            # (M, D)
    best_prior_idx = jnp.argmax(overlaps, axis=1)             # (M,)
    best_truth_overlap = jnp.max(overlaps, axis=0)            # (D,)
    best_truth_idx = jnp.argmax(overlaps, axis=0)             # (D,)
    best_truth_overlap = best_truth_overlap.at[best_prior_idx].set(2.0)
    best_truth_idx = best_truth_idx.at[best_prior_idx].set(
        jnp.arange(truths.shape[0], dtype=best_truth_idx.dtype))
    matches = truths[best_truth_idx]
    conf = labels[best_truth_idx].astype(jnp.int32) + 1
    conf = jnp.where(best_truth_overlap < threshold, 0, conf)
    loc = _encode(matches, dbox, variances)
    return loc, conf


# ------------------------------ forward pass --------------------------------

def multibox_loss(loc_data, conf_data, dbox_list, targets,
                  jaccard_thresh=JACCARD_THRESH, negpos_ratio=NEG_POS_RATIO,
                  conf_stream_dtype=jnp.bfloat16, max_neg_k=2048):
    """predictions = (loc [B,D,4], conf [B,D,C], dbox [D,4]); targets [B,M,5]."""
    _, num_dbox, _ = conf_data.shape
    truths = targets[..., :-1]
    labels = targets[..., -1]
    loc_t, conf_t_label = jax.vmap(
        lambda t, l: _match_single(t, l, dbox_list, jaccard_thresh, VARIANCES)
    )(truths, labels)

    # ---- lane-dense operands for the Pallas kernel (single full-D tile) -----
    d_pad = ((num_dbox + 127) // 128) * 128
    pad = d_pad - num_dbox
    padw = ((0, 0), (0, 0), (0, pad))

    # Cast conf to the streaming dtype *before* the transpose so the layout
    # pass writes half the bytes; XLA fuses convert+transpose+pad.  Kernel
    # math stays f32 (bf16 is only a convert-on-load, safe on v5e too).
    conf_t = jnp.pad(jnp.transpose(conf_data.astype(conf_stream_dtype), (0, 2, 1)), padw)
    locp_t = jnp.pad(jnp.transpose(loc_data, (0, 2, 1)), padw)
    loct_t = jnp.pad(jnp.transpose(loc_t, (0, 2, 1)), padw)
    label3 = jnp.pad(conf_t_label[:, None, :].astype(jnp.int32), padw)  # pad=0=background

    ce, sl1_box = _perbox_losses(conf_t, label3, locp_t, loct_t)

    # ---- hard-negative mining (plain-JAX glue, top_k instead of full sort) --
    # TODO(synk): static-K top_k + k-th-value threshold replaces the exact
    # double-argsort rank; identical selection only while num_neg <= K and CE
    # values at the threshold are distinct.
    valid = (jnp.arange(d_pad) < num_dbox)[None, :]             # (1, Dp)
    pos = label3[:, 0, :] > 0                                   # (B, Dp)
    num_pos = jnp.sum(pos, axis=1).astype(jnp.int32)            # (B,)
    mining = jnp.where(valid, jnp.where(pos, 0.0, ce), -jnp.inf)
    num_neg = jnp.minimum(num_pos * negpos_ratio, num_dbox)     # clamp max=num_dbox (spec)
    k = int(min(d_pad, max_neg_k))
    num_neg = jnp.minimum(num_neg, k)
    topv = jax.lax.top_k(mining, k)[0]                          # (B, k) descending
    k_idx = jnp.clip(num_neg - 1, 0, k - 1)
    kth = jnp.take_along_axis(topv, k_idx[:, None], axis=1)     # (B, 1)
    kth = jnp.where((num_neg > 0)[:, None], kth, jnp.inf)
    neg = (mining >= kth) & jnp.logical_not(pos) & valid

    # ---- final normalized losses (tiny scalar math, plain JAX) --------------
    sel = (pos | neg).astype(jnp.float32)
    n = jnp.maximum(jnp.sum(num_pos).astype(jnp.float32), 1.0)  # guard N == 0
    loss_l = jnp.sum(sl1_box) / n
    loss_c = jnp.sum(ce * sel) / n
    return loss_l, loss_c


if __name__ == "__main__":
    key = jax.random.PRNGKey(0)
    B, D, C, M = 2, 256, 21, 3                       # small stand-in for (B, 8732, 21)
    k = jax.random.split(key, 7)

    loc_data = jax.random.normal(k[0], (B, D, 4), jnp.float32) * 0.1
    conf_data = jax.random.normal(k[1], (B, D, C), jnp.float32)

    # default boxes in (cx, cy, w, h), all in [0, 1]
    cxcy = jax.random.uniform(k[2], (D, 2), jnp.float32, 0.05, 0.95)
    wh = jax.random.uniform(k[3], (D, 2), jnp.float32, 0.10, 0.50)
    dbox_list = jnp.concatenate([cxcy, wh], axis=1)

    # targets [B, M, 5] = [xmin, ymin, xmax, ymax, label_ind]
    xy0 = jax.random.uniform(k[4], (B, M, 2), jnp.float32, 0.05, 0.45)
    sz = jax.random.uniform(k[5], (B, M, 2), jnp.float32, 0.20, 0.45)
    xy1 = jnp.clip(xy0 + sz, 0.0, 1.0)
    labels = jax.random.randint(k[6], (B, M, 1), 0, C - 1).astype(jnp.float32)
    targets = jnp.concatenate([xy0, xy1, labels], axis=-1)

    loss_l, loss_c = jax.jit(multibox_loss)(loc_data, conf_data, dbox_list, targets)
    jax.block_until_ready((loss_l, loss_c))
    print("KERNEL_OK")
</pallas_src>

<mosaic_0001>
module attributes {stable_mosaic.version = 11 : i64} {
  func.func @_perbox_loss_kernel(%arg0: i32, %arg1: memref<1x21x256xbf16, #tpu.memory_space<vmem>>, %arg2: memref<1x1x256xi32, #tpu.memory_space<vmem>>, %arg3: memref<1x4x256xf32, #tpu.memory_space<vmem>>, %arg4: memref<1x4x256xf32, #tpu.memory_space<vmem>>, %arg5: memref<1x1x256xf32, #tpu.memory_space<vmem>>, %arg6: memref<1x1x256xf32, #tpu.memory_space<vmem>>) attributes {dimension_semantics = [#tpu.dimension_semantics<parallel>], iteration_bounds = array<i64: 2>, scalar_prefetch = 0 : i64, scratch_operands = 0 : i64, tpu.core_type = #tpu.core_type<tc>, window_params = [{transform_indices = @transform_0, window_bounds = array<i64: 1, 21, 256>}, {transform_indices = @transform_1, window_bounds = array<i64: 1, 1, 256>}, {transform_indices = @transform_2, window_bounds = array<i64: 1, 4, 256>}, {transform_indices = @transform_3, window_bounds = array<i64: 1, 4, 256>}, {transform_indices = @transform_4, window_bounds = array<i64: 1, 1, 256>}, {transform_indices = @transform_5, window_bounds = array<i64: 1, 1, 256>}]} {
    %c0 = arith.constant 0 : index
    %c0_0 = arith.constant 0 : index
    %c0_1 = arith.constant 0 : index
    %0 = vector.load %arg1[%c0, %c0_0, %c0_1] : memref<1x21x256xbf16, #tpu.memory_space<vmem>>, vector<1x21x256xbf16>
    %1 = arith.extf %0 : vector<1x21x256xbf16> to vector<1x21x256xf32>
    %c0_2 = arith.constant 0 : index
    %c0_3 = arith.constant 0 : index
    %c0_4 = arith.constant 0 : index
    %2 = vector.load %arg2[%c0_2, %c0_3, %c0_4] : memref<1x1x256xi32, #tpu.memory_space<vmem>>, vector<1x1x256xi32>
    %cst = arith.constant dense<0xFF800000> : vector<1x256xf32>
    %3 = vector.multi_reduction <maximumf>, %1, %cst [1] : vector<1x21x256xf32> to vector<1x256xf32>
    %4 = vector.shape_cast %3 : vector<1x256xf32> to vector<1x1x256xf32>
    %5 = vector.broadcast %4 : vector<1x1x256xf32> to vector<1x21x256xf32>
    %6 = arith.subf %1, %5 : vector<1x21x256xf32>
    %7 = math.exp %6 : vector<1x21x256xf32>
    %cst_5 = arith.constant dense<0.000000e+00> : vector<1x256xf32>
    %8 = vector.multi_reduction <add>, %7, %cst_5 [1] : vector<1x21x256xf32> to vector<1x256xf32>
    %9 = vector.shape_cast %8 : vector<1x256xf32> to vector<1x1x256xf32>
    %10 = math.log %9 : vector<1x1x256xf32>
    %11 = arith.addf %10, %4 : vector<1x1x256xf32>
    %12 = tpu.iota {dimensions = array<i32: 1>} : vector<1x21x256xi32>
    %13 = vector.broadcast %2 : vector<1x1x256xi32> to vector<1x21x256xi32>
    %14 = arith.cmpi eq, %12, %13 : vector<1x21x256xi32>
    %15 = arith.extui %14 : vector<1x21x256xi1> to vector<1x21x256xi32>
    %16 = arith.sitofp %15 : vector<1x21x256xi32> to vector<1x21x256xf32>
    %17 = arith.mulf %1, %16 : vector<1x21x256xf32>
    %cst_6 = arith.constant dense<0.000000e+00> : vector<1x256xf32>
    %18 = vector.multi_reduction <add>, %17, %cst_6 [1] : vector<1x21x256xf32> to vector<1x256xf32>
    %19 = vector.shape_cast %18 : vector<1x256xf32> to vector<1x1x256xf32>
    %20 = arith.subf %11, %19 : vector<1x1x256xf32>
    %c0_7 = arith.constant 0 : index
    %c0_8 = arith.constant 0 : index
    %c0_9 = arith.constant 0 : index
    %21 = vector.load %arg5[%c0_7, %c0_8, %c0_9] : memref<1x1x256xf32, #tpu.memory_space<vmem>>, vector<1x1x256xf32>
    tpu.vector_store %arg5[%c0_7, %c0_8, %c0_9], %20 {strides = array<i32>} : memref<1x1x256xf32, #tpu.memory_space<vmem>>, vector<1x1x256xf32>,
    %c0_i32 = arith.constant 0 : i32
    %22 = vector.broadcast %c0_i32 : i32 to vector<1x1x256xi32>
    %23 = arith.cmpi sgt, %2, %22 : vector<1x1x256xi32>
    %c0_10 = arith.constant 0 : index
    %c0_11 = arith.constant 0 : index
    %c0_12 = arith.constant 0 : index
    %24 = vector.load %arg3[%c0_10, %c0_11, %c0_12] : memref<1x4x256xf32, #tpu.memory_space<vmem>>, vector<1x4x256xf32>
    %c0_13 = arith.constant 0 : index
    %c0_14 = arith.constant 0 : index
    %c0_15 = arith.constant 0 : index
    %25 = vector.load %arg4[%c0_13, %c0_14, %c0_15] : memref<1x4x256xf32, #tpu.memory_space<vmem>>, vector<1x4x256xf32>
    %26 = arith.subf %24, %25 : vector<1x4x256xf32>
    %cst_16 = arith.constant 0.000000e+00 : f32
    %27 = vector.shape_cast %23 : vector<1x1x256xi1> to vector<1x1x256xi1>
    %28 = vector.broadcast %27 : vector<1x1x256xi1> to vector<1x4x256xi1>
    %29 = vector.broadcast %cst_16 : f32 to vector<1x4x256xf32>
    %30 = arith.select %28, %26, %29 : vector<1x4x256xi1>, vector<1x4x256xf32>
    %31 = math.absf %30 : vector<1x4x256xf32>
    %cst_17 = arith.constant 1.000000e+00 : f32
    %32 = vector.broadcast %cst_17 : f32 to vector<1x4x256xf32>
    %33 = arith.cmpf olt, %31, %32 : vector<1x4x256xf32>
    %cst_18 = arith.constant 5.000000e-01 : f32
    %34 = vector.broadcast %cst_18 : f32 to vector<1x4x256xf32>
    %35 = arith.mulf %34, %31 : vector<1x4x256xf32>
    %36 = arith.mulf %35, %31 : vector<1x4x256xf32>
    %cst_19 = arith.constant 5.000000e-01 : f32
    %37 = vector.broadcast %cst_19 : f32 to vector<1x4x256xf32>
    %38 = arith.subf %31, %37 : vector<1x4x256xf32>
    %39 = arith.select %33, %36, %38 : vector<1x4x256xi1>, vector<1x4x256xf32>
    %cst_20 = arith.constant dense<0.000000e+00> : vector<1x256xf32>
    %40 = vector.multi_reduction <add>, %39, %cst_20 [1] : vector<1x4x256xf32> to vector<1x256xf32>
    %41 = vector.shape_cast %40 : vector<1x256xf32> to vector<1x1x256xf32>
    %c0_21 = arith.constant 0 : index
    %c0_22 = arith.constant 0 : index
    %c0_23 = arith.constant 0 : index
    %42 = vector.load %arg6[%c0_21, %c0_22, %c0_23] : memref<1x1x256xf32, #tpu.memory_space<vmem>>, vector<1x1x256xf32>
    tpu.vector_store %arg6[%c0_21, %c0_22, %c0_23], %41 {strides = array<i32>} : memref<1x1x256xf32, #tpu.memory_space<vmem>>, vector<1x1x256xf32>,
    return
  }
  func.func @transform_0(%arg0: i32) -> (i32, i32, i32) {
    %c0_i32 = arith.constant 0 : i32
    %c0_i32_0 = arith.constant 0 : i32
    %c0_i32_1 = arith.constant 0 : i32
    return %arg0, %c0_i32, %c0_i32_0 : i32, i32, i32
  }
  func.func @transform_1(%arg0: i32) -> (i32, i32, i32) {
    %c0_i32 = arith.constant 0 : i32
    %c0_i32_0 = arith.constant 0 : i32
    %c0_i32_1 = arith.constant 0 : i32
    return %arg0, %c0_i32, %c0_i32_0 : i32, i32, i32
  }
  func.func @transform_2(%arg0: i32) -> (i32, i32, i32) {
    %c0_i32 = arith.constant 0 : i32
    %c0_i32_0 = arith.constant 0 : i32
    %c0_i32_1 = arith.constant 0 : i32
    return %arg0, %c0_i32, %c0_i32_0 : i32, i32, i32
  }
  func.func @transform_3(%arg0: i32) -> (i32, i32, i32) {
    %c0_i32 = arith.constant 0 : i32
    %c0_i32_0 = arith.constant 0 : i32
    %c0_i32_1 = arith.constant 0 : i32
    return %arg0, %c0_i32, %c0_i32_0 : i32, i32, i32
  }
  func.func @transform_4(%arg0: i32) -> (i32, i32, i32) {
    %c0_i32 = arith.constant 0 : i32
    %c0_i32_0 = arith.constant 0 : i32
    %c0_i32_1 = arith.constant 0 : i32
    return %arg0, %c0_i32, %c0_i32_0 : i32, i32, i32
  }
  func.func @transform_5(%arg0: i32) -> (i32, i32, i32) {
    %c0_i32 = arith.constant 0 : i32
    %c0_i32_0 = arith.constant 0 : i32
    %c0_i32_1 = arith.constant 0 : i32
    return %arg0, %c0_i32, %c0_i32_0 : i32, i32, i32
  }
}

</mosaic_0001>

<llo_original>
// kernel: multibox_loss.1
$region0: #{multibox_loss.1}
  #allocation0 [shape = 'u32[]', space=smem, size = 0x4, offset = 0x4, fixed_abs, tag = 'smem constant byte address 0x4 - core index']
  #allocation1 [shape = 'u32[144,128]{1,0:T(1,128)}', space=vmem, size = 0x12000, scoped, tag = 'internal scratch']
  %s0 = inlined_call_operand.vmem [shape: bf16[2,21,256], index: 0, kind: input, shape index: {}]
  %s1 = inlined_call_operand.vmem [shape: s32[2,1,256], index: 1, kind: input, shape index: {}]
  %s2 = inlined_call_operand.vmem [shape: f32[2,4,256], index: 2, kind: input, shape index: {}]
  %s3 = inlined_call_operand.vmem [shape: f32[2,4,256], index: 3, kind: input, shape index: {}]
  %s4 = inlined_call_operand.vmem [shape: f32[2,1,256], index: 4, kind: output, shape index: {0}]
  %s5 = inlined_call_operand.vmem [shape: f32[2,1,256], index: 5, kind: output, shape index: {1}]
  %6 = xla_tuple %s4, %s5
  %s7 = sld [smem:[#allocation0]]
  $region57: #{multibox_loss.1} parent=0
    _
  %s9 = ssub.s32 1, %s7
  %s10 = scalar_select 0, %s9, %s7
  loop: start=0, step=1, limit=4
  $region2: #{multibox_loss.1} parent=0 // loop_pre_header
    _
  $region3: #{multibox_loss.1} parent=0 // loop_header
    %s12 = sphi 0, %s16
    %p13 = scmp.ge.s32.totalorder %s12, 4
    %s22 = sphi 0, %s24
    %s25 = sphi 0, %s22
    %s26 = sphi 0, %s25
    %s42 = sphi 0, %s26
    %s48 = sphi 0, %s50
    %s51 = sphi 0, %s48
    %s52 = sphi 0, %s51
    %s68 = sphi 0, %s52
    %s74 = sphi 0, %s76
    %s77 = sphi 0, %s74
    %s78 = sphi 0, %s77
    %s94 = sphi 0, %s78
    %s100 = sphi 0, %s102
    %s103 = sphi 0, %s100
    %s104 = sphi 0, %s103
    %s120 = sphi 0, %s104
    %s126 = sphi 0, %s128
    %s129 = sphi 0, %s126
    %s130 = sphi 0, %s129
    %s146 = sphi 0, %s130
    %s152 = sphi 0, %s154
    %s155 = sphi 0, %s152
    %s156 = sphi 0, %s155
    %s172 = sphi 0, %s156
  $region4: #{multibox_loss.1} parent=0 // loop_header_branch
    %15 = sbr.rel (%p13) target = $region8
  $region5: #{multibox_loss.1} parent=0 // loop_body
    %s17 = ssub.s32 %s12, 1
    %s18 = ssub.s32 %s12, 2
    %s19 = sadd.s32 %s12, 1
    %s20 = ssub.s32 %s12, %s19
    %p21 = scmp.eq.s32.totalorder %s20, 0
    %s23 = sadd.s32 %s22, 1
    %s24 = scalar_select %p21, %s22, %s23
    %p27 = pneg %p21
    %p28 = scmp.eq.s32.totalorder %s12, 1
    %p29 = por %p27, %p28
    %p30 = scmp.ne.s32.totalorder %s22, %s25
    %p31 = scmp.eq.s32.totalorder %s12, 0
    %p32 = por %p30, %p31
    %p33 = scmp.ne.s32.totalorder %s22, %s25
    %p34 = scmp.eq.s32.totalorder %s17, 1
    %p35 = por %p33, %p34
    %p36 = scmp.ne.s32.totalorder %s25, %s26
    %p37 = scmp.eq.s32.totalorder %s17, 0
    %p38 = por %p36, %p37
    %p39 = scmp.ne.s32.totalorder %s25, %s26
    %p40 = scmp.eq.s32.totalorder %s18, 1
    %p41 = por %p39, %p40
    %p43 = scmp.ne.s32.totalorder %s26, %s42
    %p44 = scmp.eq.s32.totalorder %s18, 0
    %p45 = por %p43, %p44
    %s46 = ssub.s32 %s12, %s19
    %p47 = scmp.eq.s32.totalorder %s46, 0
    %s49 = sadd.s32 %s48, 1
    %s50 = scalar_select %p47, %s48, %s49
    %p53 = pneg %p47
    %p54 = scmp.eq.s32.totalorder %s12, 1
    %p55 = por %p53, %p54
    %p56 = scmp.ne.s32.totalorder %s48, %s51
    %p57 = scmp.eq.s32.totalorder %s12, 0
    %p58 = por %p56, %p57
    %p59 = scmp.ne.s32.totalorder %s48, %s51
    %p60 = scmp.eq.s32.totalorder %s17, 1
    %p61 = por %p59, %p60
    %p62 = scmp.ne.s32.totalorder %s51, %s52
    %p63 = scmp.eq.s32.totalorder %s17, 0
    %p64 = por %p62, %p63
    %p65 = scmp.ne.s32.totalorder %s51, %s52
    %p66 = scmp.eq.s32.totalorder %s18, 1
    %p67 = por %p65, %p66
    %p69 = scmp.ne.s32.totalorder %s52, %s68
    %p70 = scmp.eq.s32.totalorder %s18, 0
    %p71 = por %p69, %p70
    %s72 = ssub.s32 %s12, %s19
    %p73 = scmp.eq.s32.totalorder %s72, 0
    %s75 = sadd.s32 %s74, 1
    %s76 = scalar_select %p73, %s74, %s75
    %p79 = pneg %p73
    %p80 = scmp.eq.s32.totalorder %s12, 1
    %p81 = por %p79, %p80
    %p82 = scmp.ne.s32.totalorder %s74, %s77
    %p83 = scmp.eq.s32.totalorder %s12, 0
    %p84 = por %p82, %p83
    %p85 = scmp.ne.s32.totalorder %s74, %s77
    %p86 = scmp.eq.s32.totalorder %s17, 1
    %p87 = por %p85, %p86
    %p88 = scmp.ne.s32.totalorder %s77, %s78
    %p89 = scmp.eq.s32.totalorder %s17, 0
    %p90 = por %p88, %p89
    %p91 = scmp.ne.s32.totalorder %s77, %s78
    %p92 = scmp.eq.s32.totalorder %s18, 1
    %p93 = por %p91, %p92
    %p95 = scmp.ne.s32.totalorder %s78, %s94
    %p96 = scmp.eq.s32.totalorder %s18, 0
    %p97 = por %p95, %p96
    %s98 = ssub.s32 %s12, %s19
    %p99 = scmp.eq.s32.totalorder %s98, 0
    %s101 = sadd.s32 %s100, 1
    %s102 = scalar_select %p99, %s100, %s101
    %p105 = pneg %p99
    %p106 = scmp.eq.s32.totalorder %s12, 1
    %p107 = por %p105, %p106
    %p108 = scmp.ne.s32.totalorder %s100, %s103
    %p109 = scmp.eq.s32.totalorder %s12, 0
    %p110 = por %p108, %p109
    %p111 = scmp.ne.s32.totalorder %s100, %s103
    %p112 = scmp.eq.s32.totalorder %s17, 1
    %p113 = por %p111, %p112
    %p114 = scmp.ne.s32.totalorder %s103, %s104
    %p115 = scmp.eq.s32.totalorder %s17, 0
    %p116 = por %p114, %p115
    %p117 = scmp.ne.s32.totalorder %s103, %s104
    %p118 = scmp.eq.s32.totalorder %s18, 1
    %p119 = por %p117, %p118
    %p121 = scmp.ne.s32.totalorder %s104, %s120
    %p122 = scmp.eq.s32.totalorder %s18, 0
    %p123 = por %p121, %p122
    %s124 = ssub.s32 %s12, %s19
    %p125 = scmp.eq.s32.totalorder %s124, 0
    %s127 = sadd.s32 %s126, 1
    %s128 = scalar_select %p125, %s126, %s127
    %p131 = pneg %p125
    %p132 = scmp.eq.s32.totalorder %s12, 1
    %p133 = por %p131, %p132
    %p134 = scmp.ne.s32.totalorder %s126, %s129
    %p135 = scmp.eq.s32.totalorder %s12, 0
    %p136 = por %p134, %p135
    %p137 = scmp.ne.s32.totalorder %s126, %s129
    %p138 = scmp.eq.s32.totalorder %s17, 1
    %p139 = por %p137, %p138
    %p140 = scmp.ne.s32.totalorder %s129, %s130
    %p141 = scmp.eq.s32.totalorder %s17, 0
    %p142 = por %p140, %p141
    %p143 = scmp.ne.s32.totalorder %s129, %s130
    %p144 = scmp.eq.s32.totalorder %s18, 1
    %p145 = por %p143, %p144
    %p147 = scmp.ne.s32.totalorder %s130, %s146
    %p148 = scmp.eq.s32.totalorder %s18, 0
    %p149 = por %p147, %p148
    %s150 = ssub.s32 %s12, %s19
    %p151 = scmp.eq.s32.totalorder %s150, 0
    %s153 = sadd.s32 %s152, 1
    %s154 = scalar_select %p151, %s152, %s153
    %p157 = pneg %p151
    %p158 = scmp.eq.s32.totalorder %s12, 1
    %p159 = por %p157, %p158
    %p160 = scmp.ne.s32.totalorder %s152, %s155
    %p161 = scmp.eq.s32.totalorder %s12, 0
    %p162 = por %p160, %p161
    %p163 = scmp.ne.s32.totalorder %s152, %s155
    %p164 = scmp.eq.s32.totalorder %s17, 1
    %p165 = por %p163, %p164
    %p166 = scmp.ne.s32.totalorder %s155, %s156
    %p167 = scmp.eq.s32.totalorder %s17, 0
    %p168 = por %p166, %p167
    %p169 = scmp.ne.s32.totalorder %s155, %s156
    %p170 = scmp.eq.s32.totalorder %s18, 1
    %p171 = por %p169, %p170
    %p173 = scmp.ne.s32.totalorder %s156, %s172
    %p174 = scmp.eq.s32.totalorder %s18, 0
    %p175 = por %p173, %p174
    %p176 = scmp.le.s32.totalorder 1, %s12
    %p177 = scmp.lt.s32.totalorder %s12, 3
    %p178 = pnand %p176, %p177
    %p179 = pneg %p178
    // Predicated region
    $region9: #{multibox_loss.1} parent=5 // pred_check
      _
    $region10: #{multibox_loss.1} parent=5 // pred_check_branch
      %181 = sbr.rel (%p178) target = $region12
    $region11: #{multibox_loss.1} parent=5 // pred_region
      %s182 = ssub.s32 %s12, 1
    $region12: #{multibox_loss.1} parent=5 // pred_fallthru
      _
    %p183 = scmp.lt.s32.totalorder %s12, 2
    // Predicated region
    $region13: #{multibox_loss.1} parent=5 // pred_check
      %p184 = pneg %p183
    $region14: #{multibox_loss.1} parent=5 // pred_check_branch
      %186 = sbr.rel (%p184) target = $region16
    $region15: #{multibox_loss.1} parent=5 // pred_region
      // Predicated region
      $region17: #{multibox_loss.1} parent=15 // pred_check
        %p187 = pneg %p32
      $region18: #{multibox_loss.1} parent=15 // pred_check_branch
        %189 = sbr.rel (%p187) target = $region20
      $region19: #{multibox_loss.1} parent=15 // pred_region
        %p190 = scmp.lt.s32.totalorder %s12, 1
        %s191 = scalar_select %p190, %s12, 1
        %s192 = smul.addr %s191, 6
        %s193 = smul.addr %s192, 4
        %s194 = scalar_lea.vmem %s0, %s193
      $region20: #{multibox_loss.1} parent=15 // pred_fallthru
        _
      // Predicated region
      $region21: #{multibox_loss.1} parent=15 // pred_check
        %p195 = pneg %p58
      $region22: #{multibox_loss.1} parent=15 // pred_check_branch
        %197 = sbr.rel (%p195) target = $region24
      $region23: #{multibox_loss.1} parent=15 // pred_region
        %p198 = scmp.lt.s32.totalorder %s12, 1
        %s199 = scalar_select %p198, %s12, 1
        %s200 = smul.addr %s199, 2
        %s201 = scalar_lea.vmem %s1, %s200
      $region24: #{multibox_loss.1} parent=15 // pred_fallthru
        _
      // Predicated region
      $region25: #{multibox_loss.1} parent=15 // pred_check
        %p202 = pneg %p84
      $region26: #{multibox_loss.1} parent=15 // pred_check_branch
        %204 = sbr.rel (%p202) target = $region28
      $region27: #{multibox_loss.1} parent=15 // pred_region
        %p205 = scmp.lt.s32.totalorder %s12, 1
        %s206 = scalar_select %p205, %s12, 1
        %s207 = smul.addr %s206, 2
        %s208 = smul.addr %s207, 4
        %s209 = scalar_lea.vmem %s2, %s208
      $region28: #{multibox_loss.1} parent=15 // pred_fallthru
        _
      // Predicated region
      $region29: #{multibox_loss.1} parent=15 // pred_check
        %p210 = pneg %p110
      $region30: #{multibox_loss.1} parent=15 // pred_check_branch
        %212 = sbr.rel (%p210) target = $region32
      $region31: #{multibox_loss.1} parent=15 // pred_region
        %p213 = scmp.lt.s32.totalorder %s12, 1
        %s214 = scalar_select %p213, %s12, 1
        %s215 = smul.addr %s214, 2
        %s216 = smul.addr %s215, 4
        %s217 = scalar_lea.vmem %s3, %s216
      $region32: #{multibox_loss.1} parent=15 // pred_fallthru
        _
    $region16: #{multibox_loss.1} parent=5 // pred_fallthru
      _
    %p218 = scmp.le.s32.totalorder 1, %s12
    %p219 = scmp.lt.s32.totalorder %s12, 3
    %p220 = pnand %p218, %p219
    %p221 = pneg %p220
    // Predicated region
    $region33: #{multibox_loss.1} parent=5 // pred_check
      _
    $region34: #{multibox_loss.1} parent=5 // pred_check_branch
      %223 = sbr.rel (%p220) target = $region36
    $region35: #{multibox_loss.1} parent=5 // pred_region
      %s224 = ssub.s32 %s12, 1
      %p225 = scmp.lt.s32.totalorder %s17, 1
      %s226 = scalar_select %p225, %s17, 1
      %s227 = smul.addr %s226, 6
      %s228 = smul.addr %s227, 4
      %s229 = scalar_lea.vmem %s0, %s228
      %p230 = pneg %p38
      %p231 = pneg %p35
      %p232 = scmp.lt.s32.totalorder %s17, 1
      %s233 = scalar_select %p232, %s17, 1
      %s234 = smul.addr %s233, 2
      %s235 = scalar_lea.vmem %s1, %s234
      %p236 = pneg %p64
      %p237 = pneg %p61
      %p238 = scmp.lt.s32.totalorder %s17, 1
      %s239 = scalar_select %p238, %s17, 1
      %s240 = smul.addr %s239, 2
      %s241 = smul.addr %s240, 4
      %s242 = scalar_lea.vmem %s2, %s241
      %p243 = pneg %p90
      %p244 = pneg %p87
      %p245 = scmp.lt.s32.totalorder %s17, 1
      %s246 = scalar_select %p245, %s17, 1
      %s247 = smul.addr %s246, 2
      %s248 = smul.addr %s247, 4
      %s249 = scalar_lea.vmem %s3, %s248
      %p250 = pneg %p116
      %p251 = pneg %p113
      %p252 = pneg %p142
      %p253 = pneg %p139
      %p254 = scmp.lt.s32.totalorder %s17, 1
      %s255 = scalar_select %p254, %s17, 1
      %s256 = smul.addr %s255, 2
      %s257 = scalar_lea.vmem %s4, %s256
      %p258 = pneg %p168
      %p259 = pneg %p165
      %p260 = scmp.lt.s32.totalorder %s17, 1
      %s261 = scalar_select %p260, %s17, 1
      %s262 = smul.addr %s261, 2
      %s263 = scalar_lea.vmem %s5, %s262
      %p264 = scmp.lt.s32.totalorder %s17, 1
      %s265 = scalar_select %p264, %s17, 1
      %s266 = smul.addr %s265, 6
      %s267 = smul.addr %s266, 4
      %s268 = scalar_lea.vmem %s0, %s267
      %p269 = scmp.lt.s32.totalorder %s17, 1
      %s270 = scalar_select %p269, %s17, 1
      %s271 = smul.addr %s270, 2
      %s272 = scalar_lea.vmem %s1, %s271
      %p273 = scmp.lt.s32.totalorder %s17, 1
      %s274 = scalar_select %p273, %s17, 1
      %s275 = smul.addr %s274, 2
      %s276 = smul.addr %s275, 4
      %s277 = scalar_lea.vmem %s2, %s276
      %p278 = scmp.lt.s32.totalorder %s17, 1
      %s279 = scalar_select %p278, %s17, 1
      %s280 = smul.addr %s279, 2
      %s281 = smul.addr %s280, 4
      %s282 = scalar_lea.vmem %s3, %s281
      %p283 = scmp.lt.s32.totalorder %s17, 1
      %s284 = scalar_select %p283, %s17, 1
      %s285 = smul.addr %s284, 2
      %s286 = scalar_lea.vmem %s4, %s285
      %p287 = scmp.lt.s32.totalorder %s17, 1
      %s288 = scalar_select %p287, %s17, 1
      %s289 = smul.addr %s288, 2
      %s290 = scalar_lea.vmem %s5, %s289
      %v291 = vld [vmem:[%s268] sm:$0xff]
      %v292 = vld [vmem:[%s268 + $0x8] sm:$0xff]
      %v293 = vld [vmem:[%s268 + $0x10] sm:$0x77]
      %v294 = vunpack.c.l.bf16 %v291
      %v295 = vunpack.c.h.bf16 %v291
      %v296 = vunpack.c.l.bf16 %v292
      %v297 = vunpack.c.h.bf16 %v292
      %v298 = vunpack.c.l.bf16 %v293
      %v299 = vunpack.c.h.bf16 %v293
      %v300 = vld [vmem:[%s272] sm:$0x3]
      %vm301 = vcmask 1044480
      %v302 = vsel %vm301, %v298, -inf
      %v303 = vmax.f32 %v294, %v302
      %v304 = vmax.f32 %v303, %v296
      %v305 = vrot.slane %v304, 4
      %v306 = vmax.f32 %v304, %v305
      %v307 = vrot.slane %v306, 2
      %v308 = vmax.f32 %v306, %v307
      %v309 = vrot.slane %v308, 1
      %v310 = vmax.f32 %v308, %v309
      %v311 = vsel %vm301, %v299, -inf
      %v312 = vmax.f32 %v295, %v311
      %v313 = vmax.f32 %v312, %v297
      %v314 = vrot.slane %v313, 4
      %v315 = vmax.f32 %v313, %v314
      %v316 = vrot.slane %v315, 2
      %v317 = vmax.f32 %v315, %v316
      %v318 = vrot.slane %v317, 1
      %v319 = vmax.f32 %v317, %v318
      %v320 = vsub.f32 %v294, %v310
      %v321 = vsub.f32 %v295, %v319
      %v322 = vsub.f32 %v296, %v310
      %v323 = vsub.f32 %v297, %v319
      %v324 = vsub.f32 %v298, %v310
      %v325 = vsub.f32 %v299, %v319
      %v326 = vmul.f32 %v320, 1.442695
      %v327 = vpow.pop %v326
      %v328 = vmul.f32 %v321, 1.442695
      %v329 = vpow.pop %v328
      %v330 = vmul.f32 %v322, 1.442695
      %v331 = vpow.pop %v330
      %v332 = vmul.f32 %v323, 1.442695
      %v333 = vpow.pop %v332
      %v334 = vmul.f32 %v324, 1.442695
      %v335 = vpow.pop %v334
      %v336 = vmul.f32 %v325, 1.442695
      %v337 = vpow.pop %v336
      %v338 = vadd.f32 %v327, %v331
      %v339 = vsel %vm301, %v335, 0.0
      %v340 = vadd.f32 %v338, %v339
      %v341 = vrot.slane %v340, 4
      %v342 = vadd.f32 %v340, %v341
      %v343 = vrot.slane %v342, 2
      %v344 = vadd.f32 %v342, %v343
      %v345 = vrot.slane %v344, 1
      %v346 = vadd.f32 %v344, %v345
      %v347 = vadd.f32 %v329, %v333
      %v348 = vsel %vm301, %v337, 0.0
      %v349 = vadd.f32 %v347, %v348
      %v350 = vrot.slane %v349, 4
      %v351 = vadd.f32 %v349, %v350
      %v352 = vrot.slane %v351, 2
      %v353 = vadd.f32 %v351, %v352
      %v354 = vrot.slane %v353, 1
      %v355 = vadd.f32 %v353, %v354
      %v356 = vlog2.pop %v346
      %v357 = vmul.f32 %v356, 0.6931472
      %v358 = vlog2.pop %v355
      %v359 = vmul.f32 %v358, 0.6931472
      %v360 = vadd.f32 %v357, %v310
      %v361 = vadd.f32 %v359, %v319
      %v362 = vlaneseq
      %v363 = vshrl.u32 %v362, 7
      %v364 = vadd.s32 %v363, 8
      %v365 = vadd.s32 %v363, 16
      %v366 = vlaneseq
      %v367 = vshrl.u32 %v366, 7
      %v368 = vsub.s32 0, %v367
      %v369 = vrot.slane %v300, %v368
      %v370 = vlaneseq
      %v371 = vshrl.u32 %v370, 7
      %v372 = vsub.s32 1, %v371
      %v373 = vrot.slane %v300, %v372
      %vm374 = vcmp.eq.s32.totalorder %v363, %v369
      %vm375 = vcmp.eq.s32.totalorder %v363, %v373
      %vm376 = vcmp.eq.s32.totalorder %v364, %v369
      %vm377 = vcmp.eq.s32.totalorder %v364, %v373
      %vm378 = vcmp.eq.s32.totalorder %v365, %v369
      %vm379 = vcmp.eq.s32.totalorder %v365, %v373
      %v380 = vsel %vm374, 1, 0
      %v381 = vsel %vm375, 1, 0
      %v382 = vsel %vm376, 1, 0
      %v383 = vsel %vm377, 1, 0
      %v384 = vsel %vm378, 1, 0
      %v385 = vsel %vm379, 1, 0
      %v386 = vcvt.s32.f32 %v380
      %v387 = vcvt.s32.f32 %v381
      %v388 = vcvt.s32.f32 %v382
      %v389 = vcvt.s32.f32 %v383
      %v390 = vcvt.s32.f32 %v384
      %v391 = vcvt.s32.f32 %v385
      %v392 = vmul.f32 %v294, %v386
      %v393 = vmul.f32 %v295, %v387
      %v394 = vmul.f32 %v296, %v388
      %v395 = vmul.f32 %v297, %v389
      %v396 = vmul.f32 %v298, %v390
      %v397 = vmul.f32 %v299, %v391
      %v398 = vadd.f32 %v392, %v394
      %v399 = vsel %vm301, %v396, 0.0
      %v400 = vadd.f32 %v398, %v399
      %v401 = vrot.slane %v400, 4
      %v402 = vadd.f32 %v400, %v401
      %v403 = vrot.slane %v402, 2
      %v404 = vadd.f32 %v402, %v403
      %v405 = vrot.slane %v404, 1
      %v406 = vadd.f32 %v404, %v405
      %v407 = vadd.f32 %v393, %v395
      %v408 = vsel %vm301, %v397, 0.0
      %v409 = vadd.f32 %v407, %v408
      %v410 = vrot.slane %v409, 4
      %v411 = vadd.f32 %v409, %v410
      %v412 = vrot.slane %v411, 2
      %v413 = vadd.f32 %v411, %v412
      %v414 = vrot.slane %v413, 1
      %v415 = vadd.f32 %v413, %v414
      %v416 = vsub.f32 %v360, %v406
      %v417 = vsub.f32 %v361, %v415
      %v420 = vcombine.low %v416, %v417
      %v422 = vunpack.c.l.s4 1966171168
      %v423 = vunpack.c.0.s8 %v422
      %v424 = vlaneseq
      %v425 = vshrl.u32 %v424, 7
      %v426 = vsub.s32 %v423, %v425
      %v427 = vrot.slane %v420, %v426
      %v429 = vunpack.c.l.s4 1966171168
      %v430 = vunpack.c.0.s8 %v429
      %v431 = vlaneseq
      %v432 = vshrl.u32 %v431, 7
      %v433 = vsub.s32 %v430, %v432
      %v434 = vrot.slane %v427, %v433
      %v436 = vlaneseq
      %vm437 = vcmp.ge.s32.totalorder %v436, 0
      %vm438 = vcmp.lt.s32.totalorder %v436, 256
      %vm439 = vmand %vm437, %vm438
      %440 = vst.msk [vmem:[%s286] sm:$0x3] %vm439, %v434
      %vm441 = vcmp.gt.s32.totalorder %v300, 0
      %v442 = vld [vmem:[%s277] sm:$0xff]
      %v443 = vld [vmem:[%s282] sm:$0xff]
      %v444 = vsub.f32 %v442, %v443
      %v445 = vsel %vm441, 1, 0
      %v446 = vlaneseq
      %v447 = vshrl.u32 %v446, 7
      %v448 = vsub.s32 0, %v447
      %v449 = vrot.slane %v445, %v448
      %v450 = vlaneseq
      %v451 = vshrl.u32 %v450, 7
      %v452 = vsub.s32 1, %v451
      %v453 = vrot.slane %v445, %v452
      %vm454 = vcmp.eq.s32.totalorder %v449, 1
      %vm455 = vcmp.eq.s32.totalorder %v453, 1
      %v457 = vcombine.high %v444, %v444
      %v459 = vsel %vm454, %v444, 0.0
      %v460 = vsel %vm455, %v457, 0.0
      %v461 = vand.u32 2147483647, %v459
      %v462 = vand.u32 2147483647, %v460
      %vm463 = vcmp.lt.f32.partialorder %v461, 1.0
      %vm464 = vcmp.lt.f32.partialorder %v462, 1.0
      %v465 = vmul.f32 %v461, 0.5
      %v466 = vmul.f32 %v462, 0.5
      %v467 = vmul.f32 %v465, %v461
      %v468 = vmul.f32 %v466, %v462
      %v469 = vsub.f32 %v461, 0.5
      %v470 = vsub.f32 %v462, 0.5
      %v471 = vsel %vm463, %v467, %v469
      %v472 = vsel %vm464, %v468, %v470
      %vm473 = vcmask 1043456
      %v474 = vsel %vm473, %v471, 0.0
      %v475 = vrot.slane %v474, 4
      %v476 = vadd.f32 %v474, %v475
      %v477 = vrot.slane %v476, 2
      %v478 = vadd.f32 %v476, %v477
      %v479 = vrot.slane %v478, 1
      %v480 = vadd.f32 %v478, %v479
      %v481 = vsel %vm473, %v472, 0.0
      %v482 = vrot.slane %v481, 4
      %v483 = vadd.f32 %v481, %v482
      %v484 = vrot.slane %v483, 2
      %v485 = vadd.f32 %v483, %v484
      %v486 = vrot.slane %v485, 1
      %v487 = vadd.f32 %v485, %v486
      %v490 = vcombine.low %v480, %v487
      %v492 = vunpack.c.l.s4 1966171168
      %v493 = vunpack.c.0.s8 %v492
      %v494 = vlaneseq
      %v495 = vshrl.u32 %v494, 7
      %v496 = vsub.s32 %v493, %v495
      %v497 = vrot.slane %v490, %v496
      %v499 = vunpack.c.l.s4 1966171168
      %v500 = vunpack.c.0.s8 %v499
      %v501 = vlaneseq
      %v502 = vshrl.u32 %v501, 7
      %v503 = vsub.s32 %v500, %v502
      %v504 = vrot.slane %v497, %v503
      %506 = vst.msk [vmem:[%s290] sm:$0x3] %vm439, %v504
      %p507 = scmp.lt.s32.totalorder %s17, 1
      %s508 = scalar_select %p507, %s17, 1
      %s509 = smul.addr %s508, 2
      %s510 = scalar_lea.vmem %s4, %s509
      %p511 = scmp.lt.s32.totalorder %s17, 1
      %s512 = scalar_select %p511, %s17, 1
      %s513 = smul.addr %s512, 2
      %s514 = scalar_lea.vmem %s5, %s513
      // Predicated region
      $region37: #{multibox_loss.1} parent=35 // pred_check
        %p515 = pneg %p139
      $region38: #{multibox_loss.1} parent=35 // pred_check_branch
        %517 = sbr.rel (%p515) target = $region40
      $region39: #{multibox_loss.1} parent=35 // pred_region
        _
      $region40: #{multibox_loss.1} parent=35 // pred_fallthru
        _
      // Predicated region
      $region41: #{multibox_loss.1} parent=35 // pred_check
        %p518 = pneg %p165
      $region42: #{multibox_loss.1} parent=35 // pred_check_branch
        %520 = sbr.rel (%p518) target = $region44
      $region43: #{multibox_loss.1} parent=35 // pred_region
        _
      $region44: #{multibox_loss.1} parent=35 // pred_fallthru
        _
    $region36: #{multibox_loss.1} parent=5 // pred_fallthru
      _
    %p521 = scmp.le.s32.totalorder 2, %s12
    // Predicated region
    $region45: #{multibox_loss.1} parent=5 // pred_check
      %p522 = pneg %p521
    $region46: #{multibox_loss.1} parent=5 // pred_check_branch
      %524 = sbr.rel (%p522) target = $region48
    $region47: #{multibox_loss.1} parent=5 // pred_region
      %s525 = ssub.s32 %s12, 2
      // Predicated region
      $region49: #{multibox_loss.1} parent=47 // pred_check
        %p526 = pneg %p145
      $region50: #{multibox_loss.1} parent=47 // pred_check_branch
        %528 = sbr.rel (%p526) target = $region52
      $region51: #{multibox_loss.1} parent=47 // pred_region
        %p529 = scmp.lt.s32.totalorder %s18, 1
        %s530 = scalar_select %p529, %s18, 1
        %s531 = smul.addr %s530, 2
        %s532 = scalar_lea.vmem %s4, %s531
      $region52: #{multibox_loss.1} parent=47 // pred_fallthru
        _
      // Predicated region
      $region53: #{multibox_loss.1} parent=47 // pred_check
        %p533 = pneg %p171
      $region54: #{multibox_loss.1} parent=47 // pred_check_branch
        %535 = sbr.rel (%p533) target = $region56
      $region55: #{multibox_loss.1} parent=47 // pred_region
        %p536 = scmp.lt.s32.totalorder %s18, 1
        %s537 = scalar_select %p536, %s18, 1
        %s538 = smul.addr %s537, 2
        %s539 = scalar_lea.vmem %s5, %s538
      $region56: #{multibox_loss.1} parent=47 // pred_fallthru
        _
    $region48: #{multibox_loss.1} parent=5 // pred_fallthru
      _
  $region6: #{multibox_loss.1} parent=0 // loop_footer
    %s16 = sadd.s32 1, %s12
  $region7: #{multibox_loss.1} parent=0 // loop_footer_branch
    %11 = sbr.rel target = $region3
  $region8: #{multibox_loss.1} parent=0 // loop_exit
    _

</llo_original>
